<compile_context>
chip_gen: v6e
topology: v6e:2x2x1
jax: 0.10.0
libtpu: 0.0.40
codegen_flags: <defaults>
</compile_context>

<pallas_src>
import jax
import jax.numpy as jnp
from jax.experimental import pallas as pl
from jax.experimental.pallas import tpu as pltpu

EPS = 1e-5
VMEM_LIMIT = 32 * 1024 * 1024  # explicit scoped-VMEM budget (safe on v5e/v6e/v7x)


# ----------------------------- Pallas kernels ------------------------------ #

def conv_stats_kernel(p_ref, w_ref, acc_ref, stats_ref):
    """Pass 1: acc = patches_tile @ W  (f32 MXU), plus per-tile partial
    per-channel sum / sum-of-squares for the global BatchNorm statistics."""
    acc = jnp.dot(p_ref[...], w_ref[...], preferred_element_type=jnp.float32)
    acc_ref[...] = acc
    s = jnp.sum(acc, axis=0, keepdims=True)           # (1, coutp)
    ss = jnp.sum(acc * acc, axis=0, keepdims=True)    # (1, coutp)
    pad = jnp.zeros((6, acc.shape[1]), jnp.float32)   # fill the 8-sublane block
    stats_ref[...] = jnp.concatenate([s, ss, pad], axis=0)[None, :, :]


def bn_relu_kernel(acc_ref, scale_ref, bias_ref, o_ref):
    """Pass 2 (conv1): y = acc*scale + bias ; relu."""
    y = acc_ref[...] * scale_ref[...] + bias_ref[...]
    o_ref[...] = jnp.maximum(y, 0.0)


def bn_add_relu_kernel(acc_ref, scale_ref, bias_ref, sc_ref, o_ref):
    """Pass 2 (conv2): y = acc*scale + bias + shortcut ; relu."""
    y = acc_ref[...] * scale_ref[...] + bias_ref[...] + sc_ref[...]
    o_ref[...] = jnp.maximum(y, 0.0)


# --------------------------- pallas_call wrappers --------------------------- #

def _round_up(x, m):
    return (x + m - 1) // m * m


def _choose_tile_m(m):
    """Large tiles for pipelining efficiency; small problems still get >=2
    tiles so the 'parallel' grid axis can be split across 2 TCs (v7x)."""
    if m >= 2048:
        return 1024
    return max(8, _round_up(pl.cdiv(m, 2), 8))


def _matmul_stats(patches, w_mat, tile_m):
    """Tiled (M) matmul producing the conv pre-activations plus per-tile
    partial BN statistics."""
    m_p, k_p = patches.shape
    coutp = w_mat.shape[1]
    n_tiles = m_p // tile_m
    flops = 2 * m_p * k_p * coutp
    bytes_accessed = 4 * (m_p * k_p + k_p * coutp + m_p * coutp
                          + n_tiles * 8 * coutp)
    return pl.pallas_call(
        conv_stats_kernel,
        out_shape=(
            jax.ShapeDtypeStruct((m_p, coutp), jnp.float32),      # acc
            jax.ShapeDtypeStruct((n_tiles, 8, coutp), jnp.float32),  # stats
        ),
        grid=(n_tiles,),
        in_specs=[
            pl.BlockSpec((tile_m, k_p), lambda i: (i, 0)),   # patch tile
            pl.BlockSpec((k_p, coutp), lambda i: (0, 0)),    # weights: resident
        ],
        out_specs=(
            pl.BlockSpec((tile_m, coutp), lambda i: (i, 0)),
            pl.BlockSpec((1, 8, coutp), lambda i: (i, 0, 0)),
        ),
        compiler_params=pltpu.CompilerParams(
            dimension_semantics=("parallel",),
            vmem_limit_bytes=VMEM_LIMIT),
        cost_estimate=pl.CostEstimate(
            flops=flops, transcendentals=0, bytes_accessed=bytes_accessed),
    )(patches, w_mat)


def _bn_relu(acc, scale, bias, tile_m, shortcut=None):
    """Tiled elementwise normalize (+ residual add) + ReLU."""
    m_p, coutp = acc.shape
    n_tiles = m_p // tile_m
    inputs = [acc, scale, bias]
    in_specs = [
        pl.BlockSpec((tile_m, coutp), lambda i: (i, 0)),
        pl.BlockSpec((1, coutp), lambda i: (0, 0)),
        pl.BlockSpec((1, coutp), lambda i: (0, 0)),
    ]
    kernel = bn_relu_kernel
    n_big = 2
    if shortcut is not None:
        inputs.append(shortcut)
        in_specs.append(pl.BlockSpec((tile_m, coutp), lambda i: (i, 0)))
        kernel = bn_add_relu_kernel
        n_big = 3
    return pl.pallas_call(
        kernel,
        out_shape=jax.ShapeDtypeStruct((m_p, coutp), jnp.float32),
        grid=(n_tiles,),
        in_specs=in_specs,
        out_specs=pl.BlockSpec((tile_m, coutp), lambda i: (i, 0)),
        compiler_params=pltpu.CompilerParams(
            dimension_semantics=("parallel",),
            vmem_limit_bytes=VMEM_LIMIT),
        cost_estimate=pl.CostEstimate(
            flops=3 * m_p * coutp, transcendentals=0,
            bytes_accessed=4 * (n_big * m_p * coutp + 2 * coutp)),
    )(*inputs)


# ------------------------------- JAX glue ----------------------------------- #

def _pad2d(a, rows, cols):
    r, c = a.shape
    return jnp.pad(a, ((0, rows - r), (0, cols - c)))


def _pad1(v, n):
    return jnp.pad(v.astype(jnp.float32), (0, n - v.shape[0]))


def _im2col(x_nhwc, stride):
    """3x3, pad=1 im2col.  Returns ((N*Ho*Wo, 9*C), (N, Ho, Wo))."""
    n, h, w, c = x_nhwc.shape
    xp = jnp.pad(x_nhwc, ((0, 0), (1, 1), (1, 1), (0, 0)))
    ho = (h + 2 - 3) // stride + 1
    wo = (w + 2 - 3) // stride + 1
    taps = []
    for kh in range(3):
        for kw in range(3):
            taps.append(
                xp[:, kh:kh + stride * (ho - 1) + 1:stride,
                      kw:kw + stride * (wo - 1) + 1:stride, :])
    p = jnp.stack(taps, axis=3)                      # (N, Ho, Wo, 9, C)
    return p.reshape(n * ho * wo, 9 * c), (n, ho, wo)


def _finalize_stats(stats, m_valid, gamma_p, beta_p):
    """Reduce per-tile partial sums -> global train-mode BN scale/bias.
    Zero-padded rows contribute 0 to both sums, so dividing by the true row
    count gives exact statistics."""
    s = jnp.sum(stats[:, 0, :], axis=0)
    ss = jnp.sum(stats[:, 1, :], axis=0)
    mean = s / m_valid
    var = jnp.maximum(ss / m_valid - mean * mean, 0.0)   # biased variance
    scale = gamma_p * jax.lax.rsqrt(var + EPS)           # rsqrt -> EUP slot
    bias = beta_p - mean * scale
    return scale.reshape(1, -1), bias.reshape(1, -1)


def basic_block_forward(x_nchw, params, stride):
    x = jnp.transpose(x_nchw, (0, 2, 3, 1)).astype(jnp.float32)   # NHWC
    n, h, w, cin = x.shape
    planes = params["w1"].shape[0]
    coutp = _round_up(planes, 128)                     # lane-dense output width

    g1 = _pad1(params["g1"], coutp)
    b1 = _pad1(params["b1"], coutp)
    g2 = _pad1(params["g2"], coutp)
    b2 = _pad1(params["b2"], coutp)

    # ---------------- conv1 (stride=s) + bn1 + relu ---------------- #
    p1, (_, h1, w1) = _im2col(x, stride)
    m1, k1 = p1.shape
    k1p = _round_up(k1, 128)
    tile1 = _choose_tile_m(m1)
    m1p = _round_up(m1, tile1)
    p1p = _pad2d(p1, m1p, k1p)
    w1m = jnp.transpose(params["w1"], (2, 3, 1, 0)).reshape(k1, planes)
    w1m = _pad2d(w1m, k1p, coutp)

    acc1, st1 = _matmul_stats(p1p, w1m, tile1)
    scale1, bias1 = _finalize_stats(st1, m1, g1, b1)
    o1p = _bn_relu(acc1, scale1, bias1, tile1)
    o1 = o1p[:m1, :planes].reshape(n, h1, w1, planes)   # stays NHWC

    # ---------------- conv2 (stride=1) + bn2 + shortcut + relu ---------------- #
    p2, _ = _im2col(o1, 1)
    m2, k2 = p2.shape
    k2p = _round_up(k2, 128)
    tile2 = _choose_tile_m(m2)
    m2p = _round_up(m2, tile2)
    p2p = _pad2d(p2, m2p, k2p)
    w2m = jnp.transpose(params["w2"], (2, 3, 1, 0)).reshape(k2, planes)
    w2m = _pad2d(w2m, k2p, coutp)

    acc2, st2 = _matmul_stats(p2p, w2m, tile2)
    scale2, bias2 = _finalize_stats(st2, m2, g2, b2)

    # shortcut, option 'A': spatial ::2 subsample + zero channel pad
    if stride != 1 or cin != planes:
        pad_c = planes // 4
        sc = x[:, ::2, ::2, :]
        sc = jnp.pad(sc, ((0, 0), (0, 0), (0, 0), (pad_c, pad_c)))
    else:
        sc = x
    sc_flat = _pad2d(sc.reshape(m2, planes), m2p, coutp)

    o2p = _bn_relu(acc2, scale2, bias2, tile2, shortcut=sc_flat)
    out = o2p[:m2, :planes].reshape(n, h1, w1, planes)
    return jnp.transpose(out, (0, 3, 1, 2))             # back to NCHW


# --------------------------- pure-JAX reference ----------------------------- #

def reference_forward(x, params, stride):
    def conv(xx, ww, s):
        return jax.lax.conv_general_dilated(
            xx, ww, (s, s), ((1, 1), (1, 1)),
            dimension_numbers=("NCHW", "OIHW", "NCHW"),
            precision=jax.lax.Precision.HIGHEST)

    def bn(xx, g, b):
        mean = jnp.mean(xx, axis=(0, 2, 3), keepdims=True)
        var = jnp.mean((xx - mean) ** 2, axis=(0, 2, 3), keepdims=True)
        return (xx - mean) / jnp.sqrt(var + EPS) * g.reshape(1, -1, 1, 1) \
               + b.reshape(1, -1, 1, 1)

    planes = params["w1"].shape[0]
    out = jax.nn.relu(bn(conv(x, params["w1"], stride), params["g1"], params["b1"]))
    out = bn(conv(out, params["w2"], 1), params["g2"], params["b2"])
    if stride != 1 or x.shape[1] != planes:
        pad_c = planes // 4
        sc = jnp.pad(x[:, :, ::2, ::2], ((0, 0), (pad_c, pad_c), (0, 0), (0, 0)))
    else:
        sc = x
    return jax.nn.relu(out + sc)


# ---------------------------------- main ------------------------------------ #

if __name__ == "__main__":
    key = jax.random.PRNGKey(0)
    k1, k2, k3, k4, k5 = jax.random.split(key, 5)

    N, in_planes, planes, H, W, stride = 2, 4, 8, 16, 16, 2

    params = {
        # conv weights in PyTorch OIHW layout (Cout, Cin, 3, 3), no bias
        "w1": 0.1 * jax.random.normal(k1, (planes, in_planes, 3, 3), jnp.float32),
        "w2": 0.1 * jax.random.normal(k2, (planes, planes, 3, 3), jnp.float32),
        # BatchNorm affine params (deterministic, non-trivial)
        "g1": 1.0 + 0.1 * jax.random.normal(k3, (planes,), jnp.float32),
        "b1": 0.05 * jnp.arange(planes, dtype=jnp.float32),
        "g2": 1.0 + 0.1 * jax.random.normal(k4, (planes,), jnp.float32),
        "b2": -0.05 * jnp.arange(planes, dtype=jnp.float32),
    }

    x = jax.random.normal(k5, (N, in_planes, H, W), jnp.float32)  # NCHW input

    out = jax.block_until_ready(basic_block_forward(x, params, stride))
    ref = jax.block_until_ready(reference_forward(x, params, stride))

    assert out.shape == (N, planes, H // stride, W // stride), out.shape
    assert jnp.allclose(out, ref, atol=1e-3, rtol=1e-3), \
        float(jnp.max(jnp.abs(out - ref)))

    print("KERNEL_OK")
</pallas_src>

<mosaic_0001>
module attributes {stable_mosaic.version = 11 : i64} {
  func.func @conv_stats_kernel(%arg0: i32, %arg1: memref<64x128xf32, #tpu.memory_space<vmem>>, %arg2: memref<128x128xf32, #tpu.memory_space<vmem>>, %arg3: memref<64x128xf32, #tpu.memory_space<vmem>>, %arg4: memref<1x8x128xf32, #tpu.memory_space<vmem>>) attributes {dimension_semantics = [#tpu.dimension_semantics<parallel>], iteration_bounds = array<i64: 2>, scalar_prefetch = 0 : i64, scratch_operands = 0 : i64, tpu.core_type = #tpu.core_type<tc>, window_params = [{transform_indices = @transform_0, window_bounds = array<i64: 64, 128>}, {pipeline_mode = #tpu.pipeline_mode<synchronous>, transform_indices = @transform_1, window_bounds = array<i64: 128, 128>}, {transform_indices = @transform_2, window_bounds = array<i64: 64, 128>}, {transform_indices = @transform_3, window_bounds = array<i64: 1, 8, 128>}]} {
    %c0 = arith.constant 0 : index
    %c0_0 = arith.constant 0 : index
    %0 = vector.load %arg1[%c0, %c0_0] : memref<64x128xf32, #tpu.memory_space<vmem>>, vector<64x128xf32>
    %c0_1 = arith.constant 0 : index
    %c0_2 = arith.constant 0 : index
    %1 = vector.load %arg2[%c0_1, %c0_2] : memref<128x128xf32, #tpu.memory_space<vmem>>, vector<128x128xf32>
    %cst = arith.constant dense<0.000000e+00> : vector<64x128xf32>
    %2 = tpu.matmul %0, %1, %cst {dimension_numbers = #tpu.dot_dimension_numbers<[1], [0], [0], [1], [0, 0, 1, 1], [], []>} : vector<64x128xf32>, vector<128x128xf32>, vector<64x128xf32> -> vector<64x128xf32>
    %c0_3 = arith.constant 0 : index
    %c0_4 = arith.constant 0 : index
    %3 = vector.load %arg3[%c0_3, %c0_4] : memref<64x128xf32, #tpu.memory_space<vmem>>, vector<64x128xf32>
    tpu.vector_store %arg3[%c0_3, %c0_4], %2 {strides = array<i32>} : memref<64x128xf32, #tpu.memory_space<vmem>>, vector<64x128xf32>,
    %cst_5 = arith.constant dense<0.000000e+00> : vector<128xf32>
    %4 = vector.multi_reduction <add>, %2, %cst_5 [0] : vector<64x128xf32> to vector<128xf32>
    %5 = vector.shape_cast %4 : vector<128xf32> to vector<1x128xf32>
    %6 = arith.mulf %2, %2 : vector<64x128xf32>
    %cst_6 = arith.constant dense<0.000000e+00> : vector<128xf32>
    %7 = vector.multi_reduction <add>, %6, %cst_6 [0] : vector<64x128xf32> to vector<128xf32>
    %8 = vector.shape_cast %7 : vector<128xf32> to vector<1x128xf32>
    %cst_7 = arith.constant 0.000000e+00 : f32
    %9 = vector.broadcast %cst_7 : f32 to vector<6x128xf32>
    %10 = tpu.concatenate %5, %8, %9 in 0 : vector<1x128xf32>, vector<1x128xf32>, vector<6x128xf32> -> vector<8x128xf32>
    %11 = vector.shape_cast %10 : vector<8x128xf32> to vector<1x8x128xf32>
    %c0_8 = arith.constant 0 : index
    %c0_9 = arith.constant 0 : index
    %c0_10 = arith.constant 0 : index
    %12 = vector.load %arg4[%c0_8, %c0_9, %c0_10] : memref<1x8x128xf32, #tpu.memory_space<vmem>>, vector<1x8x128xf32>
    tpu.vector_store %arg4[%c0_8, %c0_9, %c0_10], %11 {strides = array<i32>} : memref<1x8x128xf32, #tpu.memory_space<vmem>>, vector<1x8x128xf32>,
    return
  }
  func.func @transform_0(%arg0: i32) -> (i32, i32) {
    %c0_i32 = arith.constant 0 : i32
    %c0_i32_0 = arith.constant 0 : i32
    return %arg0, %c0_i32 : i32, i32
  }
  func.func @transform_1(%arg0: i32) -> (i32, i32) {
    %c0_i32 = arith.constant 0 : i32
    %c0_i32_0 = arith.constant 0 : i32
    %c0_i32_1 = arith.constant 0 : i32
    return %c0_i32, %c0_i32_0 : i32, i32
  }
  func.func @transform_2(%arg0: i32) -> (i32, i32) {
    %c0_i32 = arith.constant 0 : i32
    %c0_i32_0 = arith.constant 0 : i32
    return %arg0, %c0_i32 : i32, i32
  }
  func.func @transform_3(%arg0: i32) -> (i32, i32, i32) {
    %c0_i32 = arith.constant 0 : i32
    %c0_i32_0 = arith.constant 0 : i32
    %c0_i32_1 = arith.constant 0 : i32
    return %arg0, %c0_i32, %c0_i32_0 : i32, i32, i32
  }
}

</mosaic_0001>

<llo_original>
// kernel: tpu_custom_call.1
$region0: #{tpu_custom_call.1}
  #allocation0 [shape = 'u32[]', space=smem, size = 0x4, offset = 0x4, fixed_abs, tag = 'smem constant byte address 0x4 - core index']
  #allocation1 [shape = 'u32[144,128]{1,0:T(1,128)}', space=vmem, size = 0x12000, scoped, tag = 'internal scratch']
  %s0 = inlined_call_operand.hbm [shape: f32[128,128], index: 0, kind: input, shape index: {}]
  %s1 = inlined_call_operand.hbm [shape: f32[128,128], index: 1, kind: input, shape index: {}]
  %s2 = inlined_call_operand.hbm [shape: f32[128,128], index: 2, kind: output, shape index: {0}]
  %s3 = inlined_call_operand.hbm [shape: f32[2,8,128], index: 3, kind: output, shape index: {1}]
  %4 = xla_tuple %s2, %s3
  %s5 = sld [smem:[#allocation0]]
  $region57: #{tpu_custom_call.1} parent=0
    _
  %s7 = ssub.s32 1, %s5
  %s8 = scalar_select 0, %s7, %s5
  $region1: #{tpu_custom_call.1} parent=0
    #allocation2 [shape = 'u8[65536]{0}', space=vmem, size = 0x10000, scoped, tag = 'input window, operand 0']
    #allocation3 [shape = 's32[2]{0}', space=sflag, size = 0x8, scoped, tag = 'scoped memory for tpu_custom_call.1']
    #allocation4 [shape = 's32[2]{0}', space=sflag, size = 0x8, scoped, tag = 'scoped memory for tpu_custom_call.1']
    #allocation5 [shape = 'u8[65536]{0}', space=vmem, size = 0x10000, scoped, tag = 'input window, operand 1, single buffered']
    #allocation6 [shape = 's32[1]{0}', space=sflag, size = 0x4, scoped, tag = 'scoped memory for tpu_custom_call.1']
    #allocation7 [shape = 'u8[65536]{0}', space=vmem, size = 0x10000, scoped, tag = 'output window, operand 0']
    #allocation8 [shape = 'u8[8192]{0}', space=vmem, size = 0x2000, scoped, tag = 'output window, operand 1']
    #allocation9 [shape = 's32[2]{0}', space=sflag, size = 0x8, scoped, tag = 'scoped memory for tpu_custom_call.1']
    %9 = vsyncpa [#allocation3], 0
    %s10 = scalar_lea.sflag [#allocation3], 1
    %11 = vsyncpa %s10, 0
    %12 = vsyncpa [#allocation6], 0
    %13 = vsyncpa [#allocation4], 0
    %s14 = scalar_lea.sflag [#allocation4], 1
    %15 = vsyncpa %s14, 0
    %16 = vsyncpa [#allocation9], 0
    %s17 = scalar_lea.sflag [#allocation9], 1
    %18 = vsyncpa %s17, 0
    loop: start=0, step=1, limit=4
    $region2: #{tpu_custom_call.1} parent=1 // loop_pre_header
      _
    $region3: #{tpu_custom_call.1} parent=1 // loop_header
      %s20 = sphi 0, %s24
      %p21 = scmp.ge.s32.totalorder %s20, 4
      %s30 = sphi 0, %s32
      %s33 = sphi 0, %s30
      %s34 = sphi 0, %s33
      %s50 = sphi 0, %s34
      %s54 = sphi 0, %s54
      %s56 = sphi 0, %s54
      %s57 = sphi 0, %s56
      %s71 = sphi 0, %s57
      %s77 = sphi 0, %s79
      %s80 = sphi 0, %s77
      %s81 = sphi 0, %s80
      %s97 = sphi 0, %s81
      %s103 = sphi 0, %s105
      %s106 = sphi 0, %s103
      %s107 = sphi 0, %s106
      %s123 = sphi 0, %s107
    $region4: #{tpu_custom_call.1} parent=1 // loop_header_branch
      %23 = sbr.rel (%p21) target = $region8
    $region5: #{tpu_custom_call.1} parent=1 // loop_body
      %s25 = ssub.s32 %s20, 1
      %s26 = ssub.s32 %s20, 2
      %s27 = sadd.s32 %s20, 1
      %s28 = ssub.s32 %s20, %s27
      %p29 = scmp.eq.s32.totalorder %s28, 0
      %s31 = sadd.s32 %s30, 1
      %s32 = scalar_select %p29, %s30, %s31
      %p35 = pneg %p29
      %p36 = scmp.eq.s32.totalorder %s20, 1
      %p37 = por %p35, %p36
      %p38 = scmp.ne.s32.totalorder %s30, %s33
      %p39 = scmp.eq.s32.totalorder %s20, 0
      %p40 = por %p38, %p39
      %p41 = scmp.ne.s32.totalorder %s30, %s33
      %p42 = scmp.eq.s32.totalorder %s25, 1
      %p43 = por %p41, %p42
      %p44 = scmp.ne.s32.totalorder %s33, %s34
      %p45 = scmp.eq.s32.totalorder %s25, 0
      %p46 = por %p44, %p45
      %p47 = scmp.ne.s32.totalorder %s33, %s34
      %p48 = scmp.eq.s32.totalorder %s26, 1
      %p49 = por %p47, %p48
      %p51 = scmp.ne.s32.totalorder %s34, %s50
      %p52 = scmp.eq.s32.totalorder %s26, 0
      %p53 = por %p51, %p52
      %s55 = sadd.s32 %s54, 1
      %p58 = scmp.eq.s32.totalorder %s20, 1
      %p59 = scmp.ne.s32.totalorder %s54, %s56
      %p60 = scmp.eq.s32.totalorder %s20, 0
      %p61 = por %p59, %p60
      %p62 = scmp.ne.s32.totalorder %s54, %s56
      %p63 = scmp.eq.s32.totalorder %s25, 1
      %p64 = por %p62, %p63
      %p65 = scmp.ne.s32.totalorder %s56, %s57
      %p66 = scmp.eq.s32.totalorder %s25, 0
      %p67 = por %p65, %p66
      %p68 = scmp.ne.s32.totalorder %s56, %s57
      %p69 = scmp.eq.s32.totalorder %s26, 1
      %p70 = por %p68, %p69
      %p72 = scmp.ne.s32.totalorder %s57, %s71
      %p73 = scmp.eq.s32.totalorder %s26, 0
      %p74 = por %p72, %p73
      %s75 = ssub.s32 %s20, %s27
      %p76 = scmp.eq.s32.totalorder %s75, 0
      %s78 = sadd.s32 %s77, 1
      %s79 = scalar_select %p76, %s77, %s78
      %p82 = pneg %p76
      %p83 = scmp.eq.s32.totalorder %s20, 1
      %p84 = por %p82, %p83
      %p85 = scmp.ne.s32.totalorder %s77, %s80
      %p86 = scmp.eq.s32.totalorder %s20, 0
      %p87 = por %p85, %p86
      %p88 = scmp.ne.s32.totalorder %s77, %s80
      %p89 = scmp.eq.s32.totalorder %s25, 1
      %p90 = por %p88, %p89
      %p91 = scmp.ne.s32.totalorder %s80, %s81
      %p92 = scmp.eq.s32.totalorder %s25, 0
      %p93 = por %p91, %p92
      %p94 = scmp.ne.s32.totalorder %s80, %s81
      %p95 = scmp.eq.s32.totalorder %s26, 1
      %p96 = por %p94, %p95
      %p98 = scmp.ne.s32.totalorder %s81, %s97
      %p99 = scmp.eq.s32.totalorder %s26, 0
      %p100 = por %p98, %p99
      %s101 = ssub.s32 %s20, %s27
      %p102 = scmp.eq.s32.totalorder %s101, 0
      %s104 = sadd.s32 %s103, 1
      %s105 = scalar_select %p102, %s103, %s104
      %p108 = pneg %p102
      %p109 = scmp.eq.s32.totalorder %s20, 1
      %p110 = por %p108, %p109
      %p111 = scmp.ne.s32.totalorder %s103, %s106
      %p112 = scmp.eq.s32.totalorder %s20, 0
      %p113 = por %p111, %p112
      %p114 = scmp.ne.s32.totalorder %s103, %s106
      %p115 = scmp.eq.s32.totalorder %s25, 1
      %p116 = por %p114, %p115
      %p117 = scmp.ne.s32.totalorder %s106, %s107
      %p118 = scmp.eq.s32.totalorder %s25, 0
      %p119 = por %p117, %p118
      %p120 = scmp.ne.s32.totalorder %s106, %s107
      %p121 = scmp.eq.s32.totalorder %s26, 1
      %p122 = por %p120, %p121
      %p124 = scmp.ne.s32.totalorder %s107, %s123
      %p125 = scmp.eq.s32.totalorder %s26, 0
      %p126 = por %p124, %p125
      %p127 = scmp.le.s32.totalorder 1, %s20
      %p128 = scmp.lt.s32.totalorder %s20, 3
      %p129 = pnand %p127, %p128
      %p130 = pneg %p129
      // Predicated region
      $region9: #{tpu_custom_call.1} parent=5 // pred_check
        _
      $region10: #{tpu_custom_call.1} parent=5 // pred_check_branch
        %132 = sbr.rel (%p129) target = $region12
      $region11: #{tpu_custom_call.1} parent=5 // pred_region
        %s133 = ssub.s32 %s20, 1
        // Predicated region
        $region13: #{tpu_custom_call.1} parent=11 // pred_check
          %p134 = pneg %p67
        $region14: #{tpu_custom_call.1} parent=11 // pred_check_branch
          %136 = sbr.rel (%p134) target = $region16
        $region15: #{tpu_custom_call.1} parent=11 // pred_region
          %s138 = ssub.s32 2048, 2048
          %139 = vsyncadd [#allocation6], %s138
          %s140 = sshll.u32 [#allocation5], 4
          %s141 = int_to_ptr.vmem [resolvable:$true] %s140
          %146 = dma.hbm_to_vmem [thread:$0]  %s1, 2048, %s141, [#allocation6], 128, 128, 8
        $region16: #{tpu_custom_call.1} parent=11 // pred_fallthru
          _
      $region12: #{tpu_custom_call.1} parent=5 // pred_fallthru
        _
      %p147 = scmp.lt.s32.totalorder %s20, 2
      // Predicated region
      $region17: #{tpu_custom_call.1} parent=5 // pred_check
        %p148 = pneg %p147
      $region18: #{tpu_custom_call.1} parent=5 // pred_check_branch
        %150 = sbr.rel (%p148) target = $region20
      $region19: #{tpu_custom_call.1} parent=5 // pred_region
        // Predicated region
        $region21: #{tpu_custom_call.1} parent=19 // pred_check
          %p151 = pneg %p40
        $region22: #{tpu_custom_call.1} parent=19 // pred_check_branch
          %153 = sbr.rel (%p151) target = $region24
        $region23: #{tpu_custom_call.1} parent=19 // pred_region
          %s154 = sand.u32 %s30, 1
          %s155 = scalar_lea.sflag [#allocation3], %s154
          %s156 = sand.u32 %s30, 1
          %s157 = smul.addr %s156, 64
          %s158 = scalar_lea.vmem [#allocation2], %s157
          %s159 = smul.u32 8, %s20
          %s161 = ssub.s32 1024, 1024
          %162 = vsyncadd %s155, %s161
          %s163 = smul.addr %s159, 128
          %s164 = scalar_lea.hbm %s0, %s163
          %s165 = sshll.u32 %s158, 4
          %s166 = int_to_ptr.vmem [resolvable:$true] %s165
          %171 = dma.hbm_to_vmem [thread:$0]  %s164, 1024, %s166, %s155, 128, 128, 8
        $region24: #{tpu_custom_call.1} parent=19 // pred_fallthru
          _
      $region20: #{tpu_custom_call.1} parent=5 // pred_fallthru
        _
      %p172 = scmp.le.s32.totalorder 1, %s20
      %p173 = scmp.lt.s32.totalorder %s20, 3
      %p174 = pnand %p172, %p173
      %p175 = pneg %p174
      // Predicated region
      $region25: #{tpu_custom_call.1} parent=5 // pred_check
        _
      $region26: #{tpu_custom_call.1} parent=5 // pred_check_branch
        %177 = sbr.rel (%p174) target = $region28
      $region27: #{tpu_custom_call.1} parent=5 // pred_region
        %s178 = ssub.s32 %s20, 1
        %s179 = sand.u32 %s33, 1
        %s180 = scalar_lea.sflag [#allocation3], %s179
        %s181 = sand.u32 %s33, 1
        %s182 = smul.addr %s181, 64
        %s183 = scalar_lea.vmem [#allocation2], %s182
        // Predicated region
        $region29: #{tpu_custom_call.1} parent=27 // pred_check
          %p184 = pneg %p46
        $region30: #{tpu_custom_call.1} parent=27 // pred_check_branch
          %186 = sbr.rel (%p184) target = $region32
        $region31: #{tpu_custom_call.1} parent=27 // pred_region
          %187 = dma.done %s180, 1024
        $region32: #{tpu_custom_call.1} parent=27 // pred_fallthru
          _
        // Predicated region
        $region33: #{tpu_custom_call.1} parent=27 // pred_check
          %p188 = pneg %p67
        $region34: #{tpu_custom_call.1} parent=27 // pred_check_branch
          %190 = sbr.rel (%p188) target = $region36
        $region35: #{tpu_custom_call.1} parent=27 // pred_region
          %191 = dma.done [#allocation6], 2048
        $region36: #{tpu_custom_call.1} parent=27 // pred_fallthru
          _
        %s192 = sand.u32 %s33, 1
        %s193 = scalar_lea.sflag [#allocation3], %s192
        %s194 = sand.u32 %s33, 1
        %s195 = smul.addr %s194, 64
        %s196 = scalar_lea.vmem [#allocation2], %s195
        %p197 = pneg %p46
        %p198 = pneg %p43
        %p199 = pneg %p67
        %p200 = pneg %p64
        %p201 = pneg %p93
        %p202 = pneg %p90
        %s203 = sand.u32 %s80, 1
        %s204 = scalar_lea.sflag [#allocation4], %s203
        %s205 = sand.u32 %s80, 1
        %s206 = smul.addr %s205, 64
        %s207 = scalar_lea.vmem [#allocation7], %s206
        %p208 = pneg %p119
        %p209 = pneg %p116
        %s210 = sand.u32 %s106, 1
        %s211 = scalar_lea.sflag [#allocation9], %s210
        %s212 = sand.u32 %s106, 1
        %s213 = smul.addr %s212, 8
        %s214 = scalar_lea.vmem [#allocation8], %s213
        %s215 = smul.u32 8, %s25
        %s216 = smul.u32 8, %s25
        %v217 = vld [vmem:[%s183] sm:$0xff]
        %v218 = vld [vmem:[%s183 + $0x8] sm:$0xff]
        %v219 = vld [vmem:[%s183 + $0x10] sm:$0xff]
        %v220 = vld [vmem:[%s183 + $0x18] sm:$0xff]
        %v221 = vld [vmem:[%s183 + $0x20] sm:$0xff]
        %v222 = vld [vmem:[%s183 + $0x28] sm:$0xff]
        %v223 = vld [vmem:[%s183 + $0x30] sm:$0xff]
        %v224 = vld [vmem:[%s183 + $0x38] sm:$0xff]
        %v225 = vld [vmem:[#allocation5] sm:$0xff]
        %v226 = vld [vmem:[#allocation5 + $0x8] sm:$0xff]
        %v227 = vld [vmem:[#allocation5 + $0x10] sm:$0xff]
        %v228 = vld [vmem:[#allocation5 + $0x18] sm:$0xff]
        %v229 = vld [vmem:[#allocation5 + $0x20] sm:$0xff]
        %v230 = vld [vmem:[#allocation5 + $0x28] sm:$0xff]
        %v231 = vld [vmem:[#allocation5 + $0x30] sm:$0xff]
        %v232 = vld [vmem:[#allocation5 + $0x38] sm:$0xff]
        %v233 = vld [vmem:[#allocation5 + $0x40] sm:$0xff]
        %v234 = vld [vmem:[#allocation5 + $0x48] sm:$0xff]
        %v235 = vld [vmem:[#allocation5 + $0x50] sm:$0xff]
        %v236 = vld [vmem:[#allocation5 + $0x58] sm:$0xff]
        %v237 = vld [vmem:[#allocation5 + $0x60] sm:$0xff]
        %v238 = vld [vmem:[#allocation5 + $0x68] sm:$0xff]
        %v239 = vld [vmem:[#allocation5 + $0x70] sm:$0xff]
        %v240 = vld [vmem:[#allocation5 + $0x78] sm:$0xff]
        %241 = vmatprep.subr.mxu0 0.0
        %242 = vmatpush1.msra.mxu0 %v240
        %243 = vmatprep.subr.mxu0 0.0
        %244 = vmatpush1.msra.mxu0 %v239
        %245 = vmatprep.subr.mxu0 0.0
        %246 = vmatpush1.msra.mxu0 %v238
        %247 = vmatprep.subr.mxu0 0.0
        %248 = vmatpush1.msra.mxu0 %v237
        %249 = vmatprep.subr.mxu0 0.0
        %250 = vmatpush1.msra.mxu0 %v236
        %251 = vmatprep.subr.mxu0 0.0
        %252 = vmatpush1.msra.mxu0 %v235
        %253 = vmatprep.subr.mxu0 0.0
        %254 = vmatpush1.msra.mxu0 %v234
        %255 = vmatprep.subr.mxu0 0.0
        %256 = vmatpush1.msra.mxu0 %v233
        %257 = vmatprep.subr.mxu0 0.0
        %258 = vmatpush1.msra.mxu0 %v232
        %259 = vmatprep.subr.mxu0 0.0
        %260 = vmatpush1.msra.mxu0 %v231
        %261 = vmatprep.subr.mxu0 0.0
        %262 = vmatpush1.msra.mxu0 %v230
        %263 = vmatprep.subr.mxu0 0.0
        %264 = vmatpush1.msra.mxu0 %v229
        %265 = vmatprep.subr.mxu0 0.0
        %266 = vmatpush1.msra.mxu0 %v228
        %267 = vmatprep.subr.mxu0 0.0
        %268 = vmatpush1.msra.mxu0 %v227
        %269 = vmatprep.subr.mxu0 0.0
        %270 = vmatpush1.msra.mxu0 %v226
        %271 = vmatprep.subr.mxu0 0.0
        %272 = vmatpush1.msra.mxu0 %v225
        %273 = vmatprep.subr.mxu0 0.0
        %274 = vmatpush2.msra.mxu0 0.0
        %275 = vmatprep.subr.mxu0 0.0
        %276 = vmatpush2.msra.mxu0 0.0
        %277 = vmatprep.subr.mxu0 0.0
        %278 = vmatpush2.msra.mxu0 0.0
        %279 = vmatprep.subr.mxu0 0.0
        %280 = vmatpush2.msra.mxu0 0.0
        %281 = vmatprep.subr.mxu0 0.0
        %282 = vmatpush2.msra.mxu0 0.0
        %283 = vmatprep.subr.mxu0 0.0
        %284 = vmatpush2.msra.mxu0 0.0
        %285 = vmatprep.subr.mxu0 0.0
        %286 = vmatpush2.msra.mxu0 0.0
        %287 = vmatprep.subr.mxu0 0.0
        %288 = vmatpush2.msra.mxu0 0.0
        %289 = vmatprep.subr.mxu0 0.0
        %290 = vmatpush2.msra.mxu0 0.0
        %291 = vmatprep.subr.mxu0 0.0
        %292 = vmatpush2.msra.mxu0 0.0
        %293 = vmatprep.subr.mxu0 0.0
        %294 = vmatpush2.msra.mxu0 0.0
        %295 = vmatprep.subr.mxu0 0.0
        %296 = vmatpush2.msra.mxu0 0.0
        %297 = vmatprep.subr.mxu0 0.0
        %298 = vmatpush2.msra.mxu0 0.0
        %299 = vmatprep.subr.mxu0 0.0
        %300 = vmatpush2.msra.mxu0 0.0
        %301 = vmatprep.subr.mxu0 0.0
        %302 = vmatpush2.msra.mxu0 0.0
        %303 = vmatprep.subr.mxu0 0.0
        %304 = vmatpush2.msra.mxu0 0.0
        %305 = vmatprep.mubr.f32.mxu0 0.0
        %306 = vmatmul.mubr.f32.gmra.mxu0 %v217
        %v307 = vpop.f32.mrf.mxu0
        %v308 = vadd.f32 0.0, %v307
        %v309 = vpop.f32.mrf.mxu0
        %310 = vmatprep.mubr.f32.mxu0 0.0
        %311 = vmatmul.mubr.f32.gmra.mxu0 %v218
        %v312 = vpop.f32.mrf.mxu0
        %v313 = vadd.f32 0.0, %v312
        %v314 = vpop.f32.mrf.mxu0
        %315 = vmatprep.mubr.f32.mxu0 0.0
        %316 = vmatmul.mubr.f32.gmra.mxu0 %v219
        %v317 = vpop.f32.mrf.mxu0
        %v318 = vadd.f32 0.0, %v317
        %v319 = vpop.f32.mrf.mxu0
        %320 = vmatprep.mubr.f32.mxu0 0.0
        %321 = vmatmul.mubr.f32.gmra.mxu0 %v220
        %v322 = vpop.f32.mrf.mxu0
        %v323 = vadd.f32 0.0, %v322
        %v324 = vpop.f32.mrf.mxu0
        %325 = vmatprep.mubr.f32.mxu0 0.0
        %326 = vmatmul.mubr.f32.gmra.mxu0 %v221
        %v327 = vpop.f32.mrf.mxu0
        %v328 = vadd.f32 0.0, %v327
        %v329 = vpop.f32.mrf.mxu0
        %330 = vmatprep.mubr.f32.mxu0 0.0
        %331 = vmatmul.mubr.f32.gmra.mxu0 %v222
        %v332 = vpop.f32.mrf.mxu0
        %v333 = vadd.f32 0.0, %v332
        %v334 = vpop.f32.mrf.mxu0
        %335 = vmatprep.mubr.f32.mxu0 0.0
        %336 = vmatmul.mubr.f32.gmra.mxu0 %v223
        %v337 = vpop.f32.mrf.mxu0
        %v338 = vadd.f32 0.0, %v337
        %v339 = vpop.f32.mrf.mxu0
        %340 = vmatprep.mubr.f32.mxu0 0.0
        %341 = vmatmul.mubr.f32.gmra.mxu0 %v224
        %v342 = vpop.f32.mrf.mxu0
        %v343 = vadd.f32 0.0, %v342
        %v344 = vpop.f32.mrf.mxu0
        %345 = vdwg.mxu0
        %346 = vst [vmem:[%s207] sm:$0xff] %v308
        %347 = vst [vmem:[%s207 + $0x8] sm:$0xff] %v313
        %348 = vst [vmem:[%s207 + $0x10] sm:$0xff] %v318
        %349 = vst [vmem:[%s207 + $0x18] sm:$0xff] %v323
        %350 = vst [vmem:[%s207 + $0x20] sm:$0xff] %v328
        %351 = vst [vmem:[%s207 + $0x28] sm:$0xff] %v333
        %352 = vst [vmem:[%s207 + $0x30] sm:$0xff] %v338
        %353 = vst [vmem:[%s207 + $0x38] sm:$0xff] %v343
        %v354 = vadd.f32 %v308, %v313
        %v355 = vadd.f32 %v354, %v318
        %v356 = vadd.f32 %v355, %v323
        %v357 = vadd.f32 %v356, %v328
        %v358 = vadd.f32 %v357, %v333
        %v359 = vadd.f32 %v358, %v338
        %v360 = vadd.f32 %v359, %v343
        %v361 = vrot.slane %v360, 4
        %v362 = vadd.f32 %v360, %v361
        %v363 = vrot.slane %v362, 2
        %v364 = vadd.f32 %v362, %v363
        %v365 = vrot.slane %v364, 1
        %v366 = vadd.f32 %v364, %v365
        %v367 = vmul.f32 %v308, %v308
        %v368 = vmul.f32 %v313, %v313
        %v369 = vmul.f32 %v318, %v318
        %v370 = vmul.f32 %v323, %v323
        %v371 = vmul.f32 %v328, %v328
        %v372 = vmul.f32 %v333, %v333
        %v373 = vmul.f32 %v338, %v338
        %v374 = vmul.f32 %v343, %v343
        %v375 = vadd.f32 %v367, %v368
        %v376 = vadd.f32 %v375, %v369
        %v377 = vadd.f32 %v376, %v370
        %v378 = vadd.f32 %v377, %v371
        %v379 = vadd.f32 %v378, %v372
        %v380 = vadd.f32 %v379, %v373
        %v381 = vadd.f32 %v380, %v374
        %v382 = vrot.slane %v381, 4
        %v383 = vadd.f32 %v381, %v382
        %v384 = vrot.slane %v383, 2
        %v385 = vadd.f32 %v383, %v384
        %v386 = vrot.slane %v385, 1
        %v387 = vadd.f32 %v385, %v386
        %vm388 = vcmask 1040384
        %v389 = vsel %vm388, %v366, %v387
        %vm390 = vcmask 1041408
        %v391 = vsel %vm390, %v389, 0.0
        %392 = vst [vmem:[%s214] sm:$0xff] %v391
        %s393 = sand.u32 %s80, 1
        %s394 = scalar_lea.sflag [#allocation4], %s393
        %s395 = sand.u32 %s80, 1
        %s396 = smul.addr %s395, 64
        %s397 = scalar_lea.vmem [#allocation7], %s396
        %s398 = sand.u32 %s106, 1
        %s399 = scalar_lea.sflag [#allocation9], %s398
        %s400 = sand.u32 %s106, 1
        %s401 = smul.addr %s400, 8
        %s402 = scalar_lea.vmem [#allocation8], %s401
        // Predicated region
        $region37: #{tpu_custom_call.1} parent=27 // pred_check
          %p403 = pneg %p90
        $region38: #{tpu_custom_call.1} parent=27 // pred_check_branch
          %405 = sbr.rel (%p403) target = $region40
        $region39: #{tpu_custom_call.1} parent=27 // pred_region
          %s406 = smul.u32 8, %s25
          %s408 = ssub.s32 1024, 1024
          %409 = vsyncadd %s394, %s408
          %s410 = smul.addr %s406, 128
          %s411 = scalar_lea.hbm %s2, %s410
          %s412 = sshll.u32 %s397, 4
          %s413 = int_to_ptr.vmem [resolvable:$true] %s412
          %418 = dma.vmem_to_hbm [thread:$0]  %s413, 1024, %s411, %s394, 128, 128, 8
        $region40: #{tpu_custom_call.1} parent=27 // pred_fallthru
          _
        // Predicated region
        $region41: #{tpu_custom_call.1} parent=27 // pred_check
          %p419 = pneg %p116
        $region42: #{tpu_custom_call.1} parent=27 // pred_check_branch
          %421 = sbr.rel (%p419) target = $region44
        $region43: #{tpu_custom_call.1} parent=27 // pred_region
          %s423 = ssub.s32 128, 128
          %424 = vsyncadd %s399, %s423
          %s425 = smul.addr %s25, 128
          %s426 = scalar_lea.hbm %s3, %s425
          %s428 = sshll.u32 %s402, 4
          %s429 = int_to_ptr.vmem [resolvable:$true] %s428
          %431 = dma.vmem_to_hbm [thread:$0]  %s429, 128, %s426, %s399
        $region44: #{tpu_custom_call.1} parent=27 // pred_fallthru
          _
      $region28: #{tpu_custom_call.1} parent=5 // pred_fallthru
        _
      %p432 = scmp.le.s32.totalorder 2, %s20
      // Predicated region
      $region45: #{tpu_custom_call.1} parent=5 // pred_check
        %p433 = pneg %p432
      $region46: #{tpu_custom_call.1} parent=5 // pred_check_branch
        %435 = sbr.rel (%p433) target = $region48
      $region47: #{tpu_custom_call.1} parent=5 // pred_region
        %s436 = ssub.s32 %s20, 2
        // Predicated region
        $region49: #{tpu_custom_call.1} parent=47 // pred_check
          %p437 = pneg %p96
        $region50: #{tpu_custom_call.1} parent=47 // pred_check_branch
          %439 = sbr.rel (%p437) target = $region52
        $region51: #{tpu_custom_call.1} parent=47 // pred_region
          %s440 = sand.u32 %s81, 1
          %s441 = scalar_lea.sflag [#allocation4], %s440
          %s442 = sand.u32 %s81, 1
          %s443 = smul.addr %s442, 64
          %s444 = scalar_lea.vmem [#allocation7], %s443
          %445 = dma.done %s441, 1024
        $region52: #{tpu_custom_call.1} parent=47 // pred_fallthru
          _
        // Predicated region
        $region53: #{tpu_custom_call.1} parent=47 // pred_check
          %p446 = pneg %p122
        $region54: #{tpu_custom_call.1} parent=47 // pred_check_branch
          %448 = sbr.rel (%p446) target = $region56
        $region55: #{tpu_custom_call.1} parent=47 // pred_region
          %s449 = sand.u32 %s107, 1
          %s450 = scalar_lea.sflag [#allocation9], %s449
          %s451 = sand.u32 %s107, 1
          %s452 = smul.addr %s451, 8
          %s453 = scalar_lea.vmem [#allocation8], %s452
          %454 = dma.done %s450, 128
        $region56: #{tpu_custom_call.1} parent=47 // pred_fallthru
          _
      $region48: #{tpu_custom_call.1} parent=5 // pred_fallthru
        _
    $region6: #{tpu_custom_call.1} parent=1 // loop_footer
      %s24 = sadd.s32 1, %s20
    $region7: #{tpu_custom_call.1} parent=1 // loop_footer_branch
      %19 = sbr.rel target = $region3
    $region8: #{tpu_custom_call.1} parent=1 // loop_exit
      _
    %455 = vsyncpa [#allocation3], 1
    %s456 = scalar_lea.sflag [#allocation3], 1
    %457 = vsyncpa %s456, 1
    %458 = vsyncpa [#allocation6], 1
    %459 = vsyncpa [#allocation4], 1
    %s460 = scalar_lea.sflag [#allocation4], 1
    %461 = vsyncpa %s460, 1
    %462 = vsyncpa [#allocation9], 1
    %s463 = scalar_lea.sflag [#allocation9], 1
    %464 = vsyncpa %s463, 1

</llo_original>
